<compile_context>
chip_gen: v7x
topology: tpu7x:2x2x1
jax: 0.10.0
libtpu: 0.0.40
codegen_flags: <defaults>
</compile_context>

<pallas_src>
import functools

import jax
import jax.numpy as jnp
from jax.experimental import pallas as pl
from jax.experimental.pallas import tpu as pltpu


def _mlp_kernel(num_linear, compute_dtype, *refs):
    """Fused MLP forward on one transposed batch tile.

    refs = (x_ref, w0, b0, ..., w_{L-1}, b_{L-1}, out_ref)
      x_ref : (in_features, batch_tile)   compute_dtype
      w_i   : (out_f_i, in_f_i)           compute_dtype
      b_i   : (out_f_i, 1)                float32
      out   : (out_dim, batch_tile)
    """
    x_ref = refs[0]
    out_ref = refs[-1]
    param_refs = refs[1:-1]

    h = x_ref[...]                                       # (in_f, bt)
    for i in range(num_linear):
        w = param_refs[2 * i][...]                       # (out_f, in_f)
        b = param_refs[2 * i + 1][...]                   # (out_f, 1) f32
        acc = jnp.dot(w, h.astype(compute_dtype),        # bf16 MXU, f32 acc
                      preferred_element_type=jnp.float32)
        acc = acc + b                                    # bias add in f32
        if i < num_linear - 1:
            h = jnp.maximum(acc, 0.0)                    # ReLU in f32
        else:
            h = acc
    out_ref[...] = h.astype(out_ref.dtype)


def mlp_forward(x, params, *, batch_tile=1024, compute_dtype=jnp.bfloat16,
                out_dtype=None):
    """Run the fused MLP Pallas kernel.

    x:      (batch, in_features) array.
    params: list of (W, b) in PyTorch layout: W (out_f, in_f), b (out_f,).
    """
    num_linear = len(params)
    batch, in_features = x.shape
    out_dim = params[-1][0].shape[0]
    if out_dtype is None:
        out_dtype = x.dtype

    # Lane-axis (batch) tiles must be multiples of 128; pad the batch so the
    # last tile is full (padded columns are computed then sliced off).
    bt = max(128, min((batch_tile // 128) * 128,
                      ((batch + 127) // 128) * 128))
    padded_batch = ((batch + bt - 1) // bt) * bt
    grid = padded_batch // bt

    # Wrapper-side layout plumbing: transpose + pad to (features, padded_batch).
    x_t = jnp.pad(x.T.astype(compute_dtype),
                  ((0, 0), (0, padded_batch - batch)))

    flat_params = []
    in_specs = [pl.BlockSpec((in_features, bt), lambda i: (0, i))]
    for w, b in params:
        w_c = w.astype(compute_dtype)                    # (out_f, in_f)
        b_c = b.reshape(-1, 1).astype(jnp.float32)       # (out_f, 1)
        flat_params.extend([w_c, b_c])
        # Weights/biases are small and stay resident across the whole grid.
        # TODO(synk): add a grid axis over out_features / K (and set
        # vmem_limit_bytes) if hlsize ever grows to ~4096+ so the resident
        # weights fit v7x's 64 MiB VMEM.
        in_specs.append(pl.BlockSpec(w_c.shape, lambda i: (0, 0)))
        in_specs.append(pl.BlockSpec(b_c.shape, lambda i: (0, 0)))

    out_spec = pl.BlockSpec((out_dim, bt), lambda i: (0, i))

    kernel = functools.partial(_mlp_kernel, num_linear, compute_dtype)

    y_t = pl.pallas_call(
        kernel,
        out_shape=jax.ShapeDtypeStruct((out_dim, padded_batch), out_dtype),
        grid_spec=pltpu.PrefetchScalarGridSpec(
            num_scalar_prefetch=0,
            grid=(grid,),
            in_specs=in_specs,
            out_specs=out_spec,
        ),
        compiler_params=pltpu.CompilerParams(
            dimension_semantics=("parallel",),   # shards across v7x's 2 TCs
        ),
    )(x_t, *flat_params)

    return y_t.T[:batch]                                 # (batch, out_dim)


def init_params(key, input_dim, num_layers, hlsize, conditional_shape=0):
    """Deterministic init matching nn.Linear shapes (W: (out, in), b: (out,))."""
    in_features = input_dim + 1 + conditional_shape
    dims = [in_features] + [hlsize] * (num_layers + 1) + [input_dim]
    params = []
    for i in range(len(dims) - 1):
        fan_in, fan_out = dims[i], dims[i + 1]
        key, kw, kb = jax.random.split(key, 3)
        bound = 1.0 / (fan_in ** 0.5)
        w = jax.random.uniform(kw, (fan_out, fan_in), jnp.float32, -bound, bound)
        b = jax.random.uniform(kb, (fan_out,), jnp.float32, -bound, bound)
        params.append((w, b))
    return params


def mlp_reference_f32(x, params):
    h = x
    for i, (w, b) in enumerate(params):
        h = h @ w.T + b
        if i < len(params) - 1:
            h = jnp.maximum(h, 0.0)
    return h


def mlp_reference_bf16(x, params, compute_dtype=jnp.bfloat16):
    """Reference with the same bf16-operand / f32-accumulation discipline."""
    h = x
    for i, (w, b) in enumerate(params):
        h = jnp.dot(h.astype(compute_dtype), w.astype(compute_dtype).T,
                    preferred_element_type=jnp.float32) + b
        if i < len(params) - 1:
            h = jnp.maximum(h, 0.0)
    return h


if __name__ == "__main__":
    # Module config: input_dim=4, num_layers=2, hlsize=32, conditional_shape=0
    # => network input has input_dim + 1 + conditional_shape = 5 features.
    input_dim, num_layers, hlsize, cond = 4, 2, 32, 0
    batch = 512          # with batch_tile=256 -> grid of 2 "parallel" steps

    key = jax.random.PRNGKey(0)
    key, kx = jax.random.split(key)
    x = jax.random.normal(kx, (batch, input_dim + 1 + cond), jnp.float32)

    params = init_params(jax.random.PRNGKey(0), input_dim, num_layers, hlsize, cond)

    out = mlp_forward(x, params, batch_tile=256)
    out = jax.block_until_ready(out)

    assert out.shape == (batch, input_dim)
    assert out.dtype == x.dtype

    # Tight check vs. a reference with identical bf16-operand/f32-accum math,
    # loose check vs. the pure-f32 reference (bf16 rounding noise only).
    ref_bf16 = mlp_reference_bf16(x, params)
    ref_f32 = mlp_reference_f32(x, params)
    assert jnp.allclose(out, ref_bf16, atol=1e-3, rtol=1e-3)
    assert jnp.allclose(out, ref_f32, atol=1e-1, rtol=1e-1)

    print("KERNEL_OK")
</pallas_src>

<mosaic_0001>
module attributes {stable_mosaic.version = 11 : i64} {
  func.func @_mlp_kernel(%arg0: i32, %arg1: memref<5x256xbf16, #tpu.memory_space<vmem>>, %arg2: memref<32x5xbf16, #tpu.memory_space<vmem>>, %arg3: memref<32x1xf32, #tpu.memory_space<vmem>>, %arg4: memref<32x32xbf16, #tpu.memory_space<vmem>>, %arg5: memref<32x1xf32, #tpu.memory_space<vmem>>, %arg6: memref<32x32xbf16, #tpu.memory_space<vmem>>, %arg7: memref<32x1xf32, #tpu.memory_space<vmem>>, %arg8: memref<4x32xbf16, #tpu.memory_space<vmem>>, %arg9: memref<4x1xf32, #tpu.memory_space<vmem>>, %arg10: memref<4x256xf32, #tpu.memory_space<vmem>>) attributes {dimension_semantics = [#tpu.dimension_semantics<parallel>], iteration_bounds = array<i64: 2>, scalar_prefetch = 0 : i64, scratch_operands = 0 : i64, tpu.core_type = #tpu.core_type<tc>, window_params = [{transform_indices = @transform_0, window_bounds = array<i64: 5, 256>}, {pipeline_mode = #tpu.pipeline_mode<synchronous>, transform_indices = @transform_1, window_bounds = array<i64: 32, 5>}, {pipeline_mode = #tpu.pipeline_mode<synchronous>, transform_indices = @transform_2, window_bounds = array<i64: 32, 1>}, {pipeline_mode = #tpu.pipeline_mode<synchronous>, transform_indices = @transform_3, window_bounds = array<i64: 32, 32>}, {pipeline_mode = #tpu.pipeline_mode<synchronous>, transform_indices = @transform_4, window_bounds = array<i64: 32, 1>}, {pipeline_mode = #tpu.pipeline_mode<synchronous>, transform_indices = @transform_5, window_bounds = array<i64: 32, 32>}, {pipeline_mode = #tpu.pipeline_mode<synchronous>, transform_indices = @transform_6, window_bounds = array<i64: 32, 1>}, {pipeline_mode = #tpu.pipeline_mode<synchronous>, transform_indices = @transform_7, window_bounds = array<i64: 4, 32>}, {pipeline_mode = #tpu.pipeline_mode<synchronous>, transform_indices = @transform_8, window_bounds = array<i64: 4, 1>}, {transform_indices = @transform_9, window_bounds = array<i64: 4, 256>}]} {
    %c0 = arith.constant 0 : index
    %c0_0 = arith.constant 0 : index
    %0 = vector.load %arg1[%c0, %c0_0] : memref<5x256xbf16, #tpu.memory_space<vmem>>, vector<5x256xbf16>
    %c0_1 = arith.constant 0 : index
    %c0_2 = arith.constant 0 : index
    %1 = vector.load %arg2[%c0_1, %c0_2] : memref<32x5xbf16, #tpu.memory_space<vmem>>, vector<32x5xbf16>
    %c0_3 = arith.constant 0 : index
    %c0_4 = arith.constant 0 : index
    %2 = vector.load %arg3[%c0_3, %c0_4] : memref<32x1xf32, #tpu.memory_space<vmem>>, vector<32x1xf32>
    %cst = arith.constant dense<0.000000e+00> : vector<32x256xf32>
    %3 = tpu.matmul %1, %0, %cst {dimension_numbers = #tpu.dot_dimension_numbers<[1], [0], [0], [1], [0, 0, 1, 1], [], []>} : vector<32x5xbf16>, vector<5x256xbf16>, vector<32x256xf32> -> vector<32x256xf32>
    %4 = vector.broadcast %2 : vector<32x1xf32> to vector<32x256xf32>
    %5 = arith.addf %3, %4 : vector<32x256xf32>
    %cst_5 = arith.constant 0.000000e+00 : f32
    %6 = vector.broadcast %cst_5 : f32 to vector<32x256xf32>
    %7 = arith.maximumf %5, %6 : vector<32x256xf32>
    %c0_6 = arith.constant 0 : index
    %c0_7 = arith.constant 0 : index
    %8 = vector.load %arg4[%c0_6, %c0_7] : memref<32x32xbf16, #tpu.memory_space<vmem>>, vector<32x32xbf16>
    %c0_8 = arith.constant 0 : index
    %c0_9 = arith.constant 0 : index
    %9 = vector.load %arg5[%c0_8, %c0_9] : memref<32x1xf32, #tpu.memory_space<vmem>>, vector<32x1xf32>
    %10 = arith.truncf %7 : vector<32x256xf32> to vector<32x256xbf16>
    %cst_10 = arith.constant dense<0.000000e+00> : vector<32x256xf32>
    %11 = tpu.matmul %8, %10, %cst_10 {dimension_numbers = #tpu.dot_dimension_numbers<[1], [0], [0], [1], [0, 0, 1, 1], [], []>} : vector<32x32xbf16>, vector<32x256xbf16>, vector<32x256xf32> -> vector<32x256xf32>
    %12 = vector.broadcast %9 : vector<32x1xf32> to vector<32x256xf32>
    %13 = arith.addf %11, %12 : vector<32x256xf32>
    %cst_11 = arith.constant 0.000000e+00 : f32
    %14 = vector.broadcast %cst_11 : f32 to vector<32x256xf32>
    %15 = arith.maximumf %13, %14 : vector<32x256xf32>
    %c0_12 = arith.constant 0 : index
    %c0_13 = arith.constant 0 : index
    %16 = vector.load %arg6[%c0_12, %c0_13] : memref<32x32xbf16, #tpu.memory_space<vmem>>, vector<32x32xbf16>
    %c0_14 = arith.constant 0 : index
    %c0_15 = arith.constant 0 : index
    %17 = vector.load %arg7[%c0_14, %c0_15] : memref<32x1xf32, #tpu.memory_space<vmem>>, vector<32x1xf32>
    %18 = arith.truncf %15 : vector<32x256xf32> to vector<32x256xbf16>
    %cst_16 = arith.constant dense<0.000000e+00> : vector<32x256xf32>
    %19 = tpu.matmul %16, %18, %cst_16 {dimension_numbers = #tpu.dot_dimension_numbers<[1], [0], [0], [1], [0, 0, 1, 1], [], []>} : vector<32x32xbf16>, vector<32x256xbf16>, vector<32x256xf32> -> vector<32x256xf32>
    %20 = vector.broadcast %17 : vector<32x1xf32> to vector<32x256xf32>
    %21 = arith.addf %19, %20 : vector<32x256xf32>
    %cst_17 = arith.constant 0.000000e+00 : f32
    %22 = vector.broadcast %cst_17 : f32 to vector<32x256xf32>
    %23 = arith.maximumf %21, %22 : vector<32x256xf32>
    %c0_18 = arith.constant 0 : index
    %c0_19 = arith.constant 0 : index
    %24 = vector.load %arg8[%c0_18, %c0_19] : memref<4x32xbf16, #tpu.memory_space<vmem>>, vector<4x32xbf16>
    %c0_20 = arith.constant 0 : index
    %c0_21 = arith.constant 0 : index
    %25 = vector.load %arg9[%c0_20, %c0_21] : memref<4x1xf32, #tpu.memory_space<vmem>>, vector<4x1xf32>
    %26 = arith.truncf %23 : vector<32x256xf32> to vector<32x256xbf16>
    %cst_22 = arith.constant dense<0.000000e+00> : vector<4x256xf32>
    %27 = tpu.matmul %24, %26, %cst_22 {dimension_numbers = #tpu.dot_dimension_numbers<[1], [0], [0], [1], [0, 0, 1, 1], [], []>} : vector<4x32xbf16>, vector<32x256xbf16>, vector<4x256xf32> -> vector<4x256xf32>
    %28 = vector.broadcast %25 : vector<4x1xf32> to vector<4x256xf32>
    %29 = arith.addf %27, %28 : vector<4x256xf32>
    %c0_23 = arith.constant 0 : index
    %c0_24 = arith.constant 0 : index
    %30 = vector.load %arg10[%c0_23, %c0_24] : memref<4x256xf32, #tpu.memory_space<vmem>>, vector<4x256xf32>
    tpu.vector_store %arg10[%c0_23, %c0_24], %29 {strides = array<i32>} : memref<4x256xf32, #tpu.memory_space<vmem>>, vector<4x256xf32>,
    return
  }
  func.func @transform_0(%arg0: i32) -> (i32, i32) {
    %c0_i32 = arith.constant 0 : i32
    %c0_i32_0 = arith.constant 0 : i32
    return %c0_i32, %arg0 : i32, i32
  }
  func.func @transform_1(%arg0: i32) -> (i32, i32) {
    %c0_i32 = arith.constant 0 : i32
    %c0_i32_0 = arith.constant 0 : i32
    %c0_i32_1 = arith.constant 0 : i32
    return %c0_i32, %c0_i32_0 : i32, i32
  }
  func.func @transform_2(%arg0: i32) -> (i32, i32) {
    %c0_i32 = arith.constant 0 : i32
    %c0_i32_0 = arith.constant 0 : i32
    %c0_i32_1 = arith.constant 0 : i32
    return %c0_i32, %c0_i32_0 : i32, i32
  }
  func.func @transform_3(%arg0: i32) -> (i32, i32) {
    %c0_i32 = arith.constant 0 : i32
    %c0_i32_0 = arith.constant 0 : i32
    %c0_i32_1 = arith.constant 0 : i32
    return %c0_i32, %c0_i32_0 : i32, i32
  }
  func.func @transform_4(%arg0: i32) -> (i32, i32) {
    %c0_i32 = arith.constant 0 : i32
    %c0_i32_0 = arith.constant 0 : i32
    %c0_i32_1 = arith.constant 0 : i32
    return %c0_i32, %c0_i32_0 : i32, i32
  }
  func.func @transform_5(%arg0: i32) -> (i32, i32) {
    %c0_i32 = arith.constant 0 : i32
    %c0_i32_0 = arith.constant 0 : i32
    %c0_i32_1 = arith.constant 0 : i32
    return %c0_i32, %c0_i32_0 : i32, i32
  }
  func.func @transform_6(%arg0: i32) -> (i32, i32) {
    %c0_i32 = arith.constant 0 : i32
    %c0_i32_0 = arith.constant 0 : i32
    %c0_i32_1 = arith.constant 0 : i32
    return %c0_i32, %c0_i32_0 : i32, i32
  }
  func.func @transform_7(%arg0: i32) -> (i32, i32) {
    %c0_i32 = arith.constant 0 : i32
    %c0_i32_0 = arith.constant 0 : i32
    %c0_i32_1 = arith.constant 0 : i32
    return %c0_i32, %c0_i32_0 : i32, i32
  }
  func.func @transform_8(%arg0: i32) -> (i32, i32) {
    %c0_i32 = arith.constant 0 : i32
    %c0_i32_0 = arith.constant 0 : i32
    %c0_i32_1 = arith.constant 0 : i32
    return %c0_i32, %c0_i32_0 : i32, i32
  }
  func.func @transform_9(%arg0: i32) -> (i32, i32) {
    %c0_i32 = arith.constant 0 : i32
    %c0_i32_0 = arith.constant 0 : i32
    return %c0_i32, %arg0 : i32, i32
  }
}

</mosaic_0001>

<llo_original>
// kernel: tpu_custom_call.1
$region0: #{tpu_custom_call.1}
  #allocation0 [shape = 'u32[]', space=smem, size = 0x4, offset = 0x4, fixed_abs, tag = 'smem constant byte address 0x4 - core index']
  #allocation1 [shape = 'u32[144,128]{1,0:T(1,128)}', space=vmem, size = 0x12000, scoped, tag = 'internal scratch']
  %s0 = inlined_call_operand.vmem [shape: bf16[5,512], index: 0, kind: input, shape index: {}]
  %s1 = inlined_call_operand.vmem [shape: bf16[32,5], index: 1, kind: input, shape index: {}]
  %s2 = inlined_call_operand.vmem [shape: f32[32,1], index: 2, kind: input, shape index: {}]
  %s3 = inlined_call_operand.vmem [shape: bf16[32,32], index: 3, kind: input, shape index: {}]
  %s4 = inlined_call_operand.vmem [shape: f32[32,1], index: 4, kind: input, shape index: {}]
  %s5 = inlined_call_operand.vmem [shape: bf16[32,32], index: 5, kind: input, shape index: {}]
  %s6 = inlined_call_operand.vmem [shape: f32[32,1], index: 6, kind: input, shape index: {}]
  %s7 = inlined_call_operand.vmem [shape: bf16[4,32], index: 7, kind: input, shape index: {}]
  %s8 = inlined_call_operand.vmem [shape: f32[4,1], index: 8, kind: input, shape index: {}]
  %s9 = inlined_call_operand.hbm [shape: f32[4,512], index: 9, kind: output, shape index: {}]
  %s10 = sld [smem:[#allocation0]]
  $region69: #{tpu_custom_call.1} parent=0
    _
  %s12 = ssub.s32 1, %s10
  %s13 = scalar_select 0, %s12, %s10
  $region1: #{tpu_custom_call.1} parent=0
    #allocation2 [shape = 'u8[8192]{0}', space=vmem, size = 0x2000, scoped, tag = 'output window, operand 0']
    #allocation3 [shape = 's32[2]{0}', space=sflag, size = 0x8, scoped, tag = 'scoped memory for tpu_custom_call.1']
    %14 = vsyncpa [#allocation3], 0
    %s15 = scalar_lea.sflag [#allocation3], 1
    %16 = vsyncpa %s15, 0
    loop: start=0, step=1, limit=4
    $region2: #{tpu_custom_call.1} parent=1 // loop_pre_header
      _
    $region3: #{tpu_custom_call.1} parent=1 // loop_header
      %s18 = sphi 0, %s22
      %p19 = scmp.ge.s32.totalorder %s18, 4
      %s28 = sphi 0, %s30
      %s31 = sphi 0, %s28
      %s32 = sphi 0, %s31
      %s48 = sphi 0, %s32
      %s52 = sphi 0, %s52
      %s54 = sphi 0, %s52
      %s55 = sphi 0, %s54
      %s69 = sphi 0, %s55
      %s73 = sphi 0, %s73
      %s75 = sphi 0, %s73
      %s76 = sphi 0, %s75
      %s90 = sphi 0, %s76
      %s94 = sphi 0, %s94
      %s96 = sphi 0, %s94
      %s97 = sphi 0, %s96
      %s111 = sphi 0, %s97
      %s115 = sphi 0, %s115
      %s117 = sphi 0, %s115
      %s118 = sphi 0, %s117
      %s132 = sphi 0, %s118
      %s136 = sphi 0, %s136
      %s138 = sphi 0, %s136
      %s139 = sphi 0, %s138
      %s153 = sphi 0, %s139
      %s157 = sphi 0, %s157
      %s159 = sphi 0, %s157
      %s160 = sphi 0, %s159
      %s174 = sphi 0, %s160
      %s178 = sphi 0, %s178
      %s180 = sphi 0, %s178
      %s181 = sphi 0, %s180
      %s195 = sphi 0, %s181
      %s199 = sphi 0, %s199
      %s201 = sphi 0, %s199
      %s202 = sphi 0, %s201
      %s216 = sphi 0, %s202
      %s222 = sphi 0, %s224
      %s225 = sphi 0, %s222
      %s226 = sphi 0, %s225
      %s242 = sphi 0, %s226
    $region4: #{tpu_custom_call.1} parent=1 // loop_header_branch
      %21 = sbr.rel (%p19) target = $region8
    $region5: #{tpu_custom_call.1} parent=1 // loop_body
      %s23 = ssub.s32 %s18, 1
      %s24 = ssub.s32 %s18, 2
      %s25 = sadd.s32 %s18, 1
      %s26 = ssub.s32 %s18, %s25
      %p27 = scmp.eq.s32.totalorder %s26, 0
      %s29 = sadd.s32 %s28, 1
      %s30 = scalar_select %p27, %s28, %s29
      %p33 = pneg %p27
      %p34 = scmp.eq.s32.totalorder %s18, 1
      %p35 = por %p33, %p34
      %p36 = scmp.ne.s32.totalorder %s28, %s31
      %p37 = scmp.eq.s32.totalorder %s18, 0
      %p38 = por %p36, %p37
      %p39 = scmp.ne.s32.totalorder %s28, %s31
      %p40 = scmp.eq.s32.totalorder %s23, 1
      %p41 = por %p39, %p40
      %p42 = scmp.ne.s32.totalorder %s31, %s32
      %p43 = scmp.eq.s32.totalorder %s23, 0
      %p44 = por %p42, %p43
      %p45 = scmp.ne.s32.totalorder %s31, %s32
      %p46 = scmp.eq.s32.totalorder %s24, 1
      %p47 = por %p45, %p46
      %p49 = scmp.ne.s32.totalorder %s32, %s48
      %p50 = scmp.eq.s32.totalorder %s24, 0
      %p51 = por %p49, %p50
      %s53 = sadd.s32 %s52, 1
      %p56 = scmp.eq.s32.totalorder %s18, 1
      %p57 = scmp.ne.s32.totalorder %s52, %s54
      %p58 = scmp.eq.s32.totalorder %s18, 0
      %p59 = por %p57, %p58
      %p60 = scmp.ne.s32.totalorder %s52, %s54
      %p61 = scmp.eq.s32.totalorder %s23, 1
      %p62 = por %p60, %p61
      %p63 = scmp.ne.s32.totalorder %s54, %s55
      %p64 = scmp.eq.s32.totalorder %s23, 0
      %p65 = por %p63, %p64
      %p66 = scmp.ne.s32.totalorder %s54, %s55
      %p67 = scmp.eq.s32.totalorder %s24, 1
      %p68 = por %p66, %p67
      %p70 = scmp.ne.s32.totalorder %s55, %s69
      %p71 = scmp.eq.s32.totalorder %s24, 0
      %p72 = por %p70, %p71
      %s74 = sadd.s32 %s73, 1
      %p77 = scmp.eq.s32.totalorder %s18, 1
      %p78 = scmp.ne.s32.totalorder %s73, %s75
      %p79 = scmp.eq.s32.totalorder %s18, 0
      %p80 = por %p78, %p79
      %p81 = scmp.ne.s32.totalorder %s73, %s75
      %p82 = scmp.eq.s32.totalorder %s23, 1
      %p83 = por %p81, %p82
      %p84 = scmp.ne.s32.totalorder %s75, %s76
      %p85 = scmp.eq.s32.totalorder %s23, 0
      %p86 = por %p84, %p85
      %p87 = scmp.ne.s32.totalorder %s75, %s76
      %p88 = scmp.eq.s32.totalorder %s24, 1
      %p89 = por %p87, %p88
      %p91 = scmp.ne.s32.totalorder %s76, %s90
      %p92 = scmp.eq.s32.totalorder %s24, 0
      %p93 = por %p91, %p92
      %s95 = sadd.s32 %s94, 1
      %p98 = scmp.eq.s32.totalorder %s18, 1
      %p99 = scmp.ne.s32.totalorder %s94, %s96
      %p100 = scmp.eq.s32.totalorder %s18, 0
      %p101 = por %p99, %p100
      %p102 = scmp.ne.s32.totalorder %s94, %s96
      %p103 = scmp.eq.s32.totalorder %s23, 1
      %p104 = por %p102, %p103
      %p105 = scmp.ne.s32.totalorder %s96, %s97
      %p106 = scmp.eq.s32.totalorder %s23, 0
      %p107 = por %p105, %p106
      %p108 = scmp.ne.s32.totalorder %s96, %s97
      %p109 = scmp.eq.s32.totalorder %s24, 1
      %p110 = por %p108, %p109
      %p112 = scmp.ne.s32.totalorder %s97, %s111
      %p113 = scmp.eq.s32.totalorder %s24, 0
      %p114 = por %p112, %p113
      %s116 = sadd.s32 %s115, 1
      %p119 = scmp.eq.s32.totalorder %s18, 1
      %p120 = scmp.ne.s32.totalorder %s115, %s117
      %p121 = scmp.eq.s32.totalorder %s18, 0
      %p122 = por %p120, %p121
      %p123 = scmp.ne.s32.totalorder %s115, %s117
      %p124 = scmp.eq.s32.totalorder %s23, 1
      %p125 = por %p123, %p124
      %p126 = scmp.ne.s32.totalorder %s117, %s118
      %p127 = scmp.eq.s32.totalorder %s23, 0
      %p128 = por %p126, %p127
      %p129 = scmp.ne.s32.totalorder %s117, %s118
      %p130 = scmp.eq.s32.totalorder %s24, 1
      %p131 = por %p129, %p130
      %p133 = scmp.ne.s32.totalorder %s118, %s132
      %p134 = scmp.eq.s32.totalorder %s24, 0
      %p135 = por %p133, %p134
      %s137 = sadd.s32 %s136, 1
      %p140 = scmp.eq.s32.totalorder %s18, 1
      %p141 = scmp.ne.s32.totalorder %s136, %s138
      %p142 = scmp.eq.s32.totalorder %s18, 0
      %p143 = por %p141, %p142
      %p144 = scmp.ne.s32.totalorder %s136, %s138
      %p145 = scmp.eq.s32.totalorder %s23, 1
      %p146 = por %p144, %p145
      %p147 = scmp.ne.s32.totalorder %s138, %s139
      %p148 = scmp.eq.s32.totalorder %s23, 0
      %p149 = por %p147, %p148
      %p150 = scmp.ne.s32.totalorder %s138, %s139
      %p151 = scmp.eq.s32.totalorder %s24, 1
      %p152 = por %p150, %p151
      %p154 = scmp.ne.s32.totalorder %s139, %s153
      %p155 = scmp.eq.s32.totalorder %s24, 0
      %p156 = por %p154, %p155
      %s158 = sadd.s32 %s157, 1
      %p161 = scmp.eq.s32.totalorder %s18, 1
      %p162 = scmp.ne.s32.totalorder %s157, %s159
      %p163 = scmp.eq.s32.totalorder %s18, 0
      %p164 = por %p162, %p163
      %p165 = scmp.ne.s32.totalorder %s157, %s159
      %p166 = scmp.eq.s32.totalorder %s23, 1
      %p167 = por %p165, %p166
      %p168 = scmp.ne.s32.totalorder %s159, %s160
      %p169 = scmp.eq.s32.totalorder %s23, 0
      %p170 = por %p168, %p169
      %p171 = scmp.ne.s32.totalorder %s159, %s160
      %p172 = scmp.eq.s32.totalorder %s24, 1
      %p173 = por %p171, %p172
      %p175 = scmp.ne.s32.totalorder %s160, %s174
      %p176 = scmp.eq.s32.totalorder %s24, 0
      %p177 = por %p175, %p176
      %s179 = sadd.s32 %s178, 1
      %p182 = scmp.eq.s32.totalorder %s18, 1
      %p183 = scmp.ne.s32.totalorder %s178, %s180
      %p184 = scmp.eq.s32.totalorder %s18, 0
      %p185 = por %p183, %p184
      %p186 = scmp.ne.s32.totalorder %s178, %s180
      %p187 = scmp.eq.s32.totalorder %s23, 1
      %p188 = por %p186, %p187
      %p189 = scmp.ne.s32.totalorder %s180, %s181
      %p190 = scmp.eq.s32.totalorder %s23, 0
      %p191 = por %p189, %p190
      %p192 = scmp.ne.s32.totalorder %s180, %s181
      %p193 = scmp.eq.s32.totalorder %s24, 1
      %p194 = por %p192, %p193
      %p196 = scmp.ne.s32.totalorder %s181, %s195
      %p197 = scmp.eq.s32.totalorder %s24, 0
      %p198 = por %p196, %p197
      %s200 = sadd.s32 %s199, 1
      %p203 = scmp.eq.s32.totalorder %s18, 1
      %p204 = scmp.ne.s32.totalorder %s199, %s201
      %p205 = scmp.eq.s32.totalorder %s18, 0
      %p206 = por %p204, %p205
      %p207 = scmp.ne.s32.totalorder %s199, %s201
      %p208 = scmp.eq.s32.totalorder %s23, 1
      %p209 = por %p207, %p208
      %p210 = scmp.ne.s32.totalorder %s201, %s202
      %p211 = scmp.eq.s32.totalorder %s23, 0
      %p212 = por %p210, %p211
      %p213 = scmp.ne.s32.totalorder %s201, %s202
      %p214 = scmp.eq.s32.totalorder %s24, 1
      %p215 = por %p213, %p214
      %p217 = scmp.ne.s32.totalorder %s202, %s216
      %p218 = scmp.eq.s32.totalorder %s24, 0
      %p219 = por %p217, %p218
      %s220 = ssub.s32 %s18, %s25
      %p221 = scmp.eq.s32.totalorder %s220, 0
      %s223 = sadd.s32 %s222, 1
      %s224 = scalar_select %p221, %s222, %s223
      %p227 = pneg %p221
      %p228 = scmp.eq.s32.totalorder %s18, 1
      %p229 = por %p227, %p228
      %p230 = scmp.ne.s32.totalorder %s222, %s225
      %p231 = scmp.eq.s32.totalorder %s18, 0
      %p232 = por %p230, %p231
      %p233 = scmp.ne.s32.totalorder %s222, %s225
      %p234 = scmp.eq.s32.totalorder %s23, 1
      %p235 = por %p233, %p234
      %p236 = scmp.ne.s32.totalorder %s225, %s226
      %p237 = scmp.eq.s32.totalorder %s23, 0
      %p238 = por %p236, %p237
      %p239 = scmp.ne.s32.totalorder %s225, %s226
      %p240 = scmp.eq.s32.totalorder %s24, 1
      %p241 = por %p239, %p240
      %p243 = scmp.ne.s32.totalorder %s226, %s242
      %p244 = scmp.eq.s32.totalorder %s24, 0
      %p245 = por %p243, %p244
      %p246 = scmp.le.s32.totalorder 1, %s18
      %p247 = scmp.lt.s32.totalorder %s18, 3
      %p248 = pnand %p246, %p247
      %p249 = pneg %p248
      // Predicated region
      $region9: #{tpu_custom_call.1} parent=5 // pred_check
        _
      $region10: #{tpu_custom_call.1} parent=5 // pred_check_branch
        %251 = sbr.rel (%p248) target = $region12
      $region11: #{tpu_custom_call.1} parent=5 // pred_region
        %s252 = ssub.s32 %s18, 1
        // Predicated region
        $region13: #{tpu_custom_call.1} parent=11 // pred_check
          %p253 = pneg %p65
        $region14: #{tpu_custom_call.1} parent=11 // pred_check_branch
          %255 = sbr.rel (%p253) target = $region16
        $region15: #{tpu_custom_call.1} parent=11 // pred_region
          _
        $region16: #{tpu_custom_call.1} parent=11 // pred_fallthru
          _
        // Predicated region
        $region17: #{tpu_custom_call.1} parent=11 // pred_check
          %p256 = pneg %p86
        $region18: #{tpu_custom_call.1} parent=11 // pred_check_branch
          %258 = sbr.rel (%p256) target = $region20
        $region19: #{tpu_custom_call.1} parent=11 // pred_region
          _
        $region20: #{tpu_custom_call.1} parent=11 // pred_fallthru
          _
        // Predicated region
        $region21: #{tpu_custom_call.1} parent=11 // pred_check
          %p259 = pneg %p107
        $region22: #{tpu_custom_call.1} parent=11 // pred_check_branch
          %261 = sbr.rel (%p259) target = $region24
        $region23: #{tpu_custom_call.1} parent=11 // pred_region
          _
        $region24: #{tpu_custom_call.1} parent=11 // pred_fallthru
          _
        // Predicated region
        $region25: #{tpu_custom_call.1} parent=11 // pred_check
          %p262 = pneg %p128
        $region26: #{tpu_custom_call.1} parent=11 // pred_check_branch
          %264 = sbr.rel (%p262) target = $region28
        $region27: #{tpu_custom_call.1} parent=11 // pred_region
          _
        $region28: #{tpu_custom_call.1} parent=11 // pred_fallthru
          _
        // Predicated region
        $region29: #{tpu_custom_call.1} parent=11 // pred_check
          %p265 = pneg %p149
        $region30: #{tpu_custom_call.1} parent=11 // pred_check_branch
          %267 = sbr.rel (%p265) target = $region32
        $region31: #{tpu_custom_call.1} parent=11 // pred_region
          _
        $region32: #{tpu_custom_call.1} parent=11 // pred_fallthru
          _
        // Predicated region
        $region33: #{tpu_custom_call.1} parent=11 // pred_check
          %p268 = pneg %p170
        $region34: #{tpu_custom_call.1} parent=11 // pred_check_branch
          %270 = sbr.rel (%p268) target = $region36
        $region35: #{tpu_custom_call.1} parent=11 // pred_region
          _
        $region36: #{tpu_custom_call.1} parent=11 // pred_fallthru
          _
        // Predicated region
        $region37: #{tpu_custom_call.1} parent=11 // pred_check
          %p271 = pneg %p191
        $region38: #{tpu_custom_call.1} parent=11 // pred_check_branch
          %273 = sbr.rel (%p271) target = $region40
        $region39: #{tpu_custom_call.1} parent=11 // pred_region
          _
        $region40: #{tpu_custom_call.1} parent=11 // pred_fallthru
          _
        // Predicated region
        $region41: #{tpu_custom_call.1} parent=11 // pred_check
          %p274 = pneg %p212
        $region42: #{tpu_custom_call.1} parent=11 // pred_check_branch
          %276 = sbr.rel (%p274) target = $region44
        $region43: #{tpu_custom_call.1} parent=11 // pred_region
          _
        $region44: #{tpu_custom_call.1} parent=11 // pred_fallthru
          _
      $region12: #{tpu_custom_call.1} parent=5 // pred_fallthru
        _
      %p277 = scmp.lt.s32.totalorder %s18, 2
      // Predicated region
      $region45: #{tpu_custom_call.1} parent=5 // pred_check
        %p278 = pneg %p277
      $region46: #{tpu_custom_call.1} parent=5 // pred_check_branch
        %280 = sbr.rel (%p278) target = $region48
      $region47: #{tpu_custom_call.1} parent=5 // pred_region
        // Predicated region
        $region49: #{tpu_custom_call.1} parent=47 // pred_check
          %p281 = pneg %p38
        $region50: #{tpu_custom_call.1} parent=47 // pred_check_branch
          %283 = sbr.rel (%p281) target = $region52
        $region51: #{tpu_custom_call.1} parent=47 // pred_region
          %s284 = smul.u32 2, %s18
          %p285 = scmp.lt.s32.totalorder %s284, 3
          %s286 = scalar_select %p285, %s284, 3
          %s287 = smul.addr %s286, 4
          %s288 = scalar_lea.vmem %s0, %s287
          %s289 = smul.u32 2, %s18
        $region52: #{tpu_custom_call.1} parent=47 // pred_fallthru
          _
      $region48: #{tpu_custom_call.1} parent=5 // pred_fallthru
        _
      %p290 = scmp.le.s32.totalorder 1, %s18
      %p291 = scmp.lt.s32.totalorder %s18, 3
      %p292 = pnand %p290, %p291
      %p293 = pneg %p292
      // Predicated region
      $region53: #{tpu_custom_call.1} parent=5 // pred_check
        _
      $region54: #{tpu_custom_call.1} parent=5 // pred_check_branch
        %295 = sbr.rel (%p292) target = $region56
      $region55: #{tpu_custom_call.1} parent=5 // pred_region
        %s296 = ssub.s32 %s18, 1
        %s297 = smul.u32 2, %s23
        %p298 = scmp.lt.s32.totalorder %s297, 3
        %s299 = scalar_select %p298, %s297, 3
        %s300 = smul.addr %s299, 4
        %s301 = scalar_lea.vmem %s0, %s300
        %p302 = pneg %p44
        %p303 = pneg %p41
        %p304 = pneg %p65
        %p305 = pneg %p62
        %p306 = pneg %p86
        %p307 = pneg %p83
        %p308 = pneg %p107
        %p309 = pneg %p104
        %p310 = pneg %p128
        %p311 = pneg %p125
        %p312 = pneg %p149
        %p313 = pneg %p146
        %p314 = pneg %p170
        %p315 = pneg %p167
        %p316 = pneg %p191
        %p317 = pneg %p188
        %p318 = pneg %p212
        %p319 = pneg %p209
        %p320 = pneg %p238
        %p321 = pneg %p235
        %s322 = sand.u32 %s225, 1
        %s323 = scalar_lea.sflag [#allocation3], %s322
        %s324 = sand.u32 %s225, 1
        %s325 = smul.addr %s324, 8
        %s326 = scalar_lea.vmem [#allocation2], %s325
        %s327 = smul.u32 2, %s23
        %p328 = scmp.lt.s32.totalorder %s327, 3
        %s329 = scalar_select %p328, %s327, 3
        %s330 = smul.addr %s329, 4
        %s331 = scalar_lea.vmem %s0, %s330
        %s332 = smul.u32 2, %s23
        %s333 = smul.u32 2, %s23
        %v335 = vld [vmem:[%s331] sm:$0x77]
        %v336 = vld [vmem:[%s1] sm:$0xf]
        %v337 = vld [vmem:[%s1 + $0x4] sm:$0xf]
        %v338 = vld [vmem:[%s1 + $0x8] sm:$0xf]
        %v339 = vld [vmem:[%s1 + $0xc] sm:$0xf]
        %v340 = vld [vmem:[%s2] sm:$0xff]
        %v341 = vld [vmem:[%s2 + $0x8] sm:$0xff]
        %v342 = vld [vmem:[%s2 + $0x10] sm:$0xff]
        %v343 = vld [vmem:[%s2 + $0x18] sm:$0xff]
        %345 = vset.pattern.permute.xlu0 0
        %346 = vperm.xlu0 %345, %v340
        %v347 = vpop.permute.xlu0 %346
        %350 = vset.pattern.permute.xlu0 0
        %351 = vperm.xlu0 %350, %v341
        %v352 = vpop.permute.xlu0 %351
        %355 = vset.pattern.permute.xlu0 0
        %356 = vperm.xlu0 %355, %v342
        %v357 = vpop.permute.xlu0 %356
        %360 = vset.pattern.permute.xlu0 0
        %361 = vperm.xlu0 %360, %v343
        %v362 = vpop.permute.xlu0 %361
        %v368 = vunpack.c.l.b16 %v336
        %v369 = vunpack.c.l.b16 %v337
        %v370 = vunpack.c.l.b16 %v338
        %v371 = vunpack.c.l.b16 %v339
        %v372 = vpack.c.b16 %v369, %v368
        %v373 = vpack.c.b16 %v371, %v370
        %v375 = vunpack.c.l.b16 %v335
        %v376 = vunpack.c.h.b16 %v335
        %v377 = vpack.c.b16 %v375, %v375
        %v378 = vpack.c.b16 %v376, %v376
        %vm379 = vcmask 39936
        %v381 = vsel %vm379, %v372, 0
        %v384 = vsel %vm379, %v373, 0
        %vm386 = vcmask 1041408
        %vm387 = vcmask 1042432
        %v388 = vsel %vm386, 4294967295, 65535
        %v389 = vsel %vm387, %v388, 0
        %v391 = vand.u32 %v377, %v389
        %v394 = vand.u32 %v378, %v389
        %396 = vmatprep.subr.bf16.mxu0 %v394
        %397 = vmatpush1.bf16.msra.mxu0 %v391
        %398 = vmatprep.subr.bf16.mxu0 0
        %399 = vmatpush1.bf16.msra.mxu0 0
        %400 = vmatprep.subr.bf16.mxu0 0
        %401 = vmatpush1.bf16.msra.mxu0 0
        %402 = vmatprep.subr.bf16.mxu0 0
        %403 = vmatpush1.bf16.msra.mxu0 0
        %404 = vmatprep.subr.bf16.mxu0 0
        %405 = vmatpush1.bf16.msra.mxu0 0
        %406 = vmatprep.subr.bf16.mxu0 0
        %407 = vmatpush1.bf16.msra.mxu0 0
        %408 = vmatprep.subr.bf16.mxu0 0
        %409 = vmatpush1.bf16.msra.mxu0 0
        %410 = vmatprep.subr.bf16.mxu0 0
        %411 = vmatpush1.bf16.msra.mxu0 0
        %412 = vmatprep.subr.bf16.mxu0 0
        %413 = vmatpush1.bf16.msra.mxu0 0
        %414 = vmatprep.subr.bf16.mxu0 0
        %415 = vmatpush1.bf16.msra.mxu0 0
        %416 = vmatprep.subr.bf16.mxu0 0
        %417 = vmatpush1.bf16.msra.mxu0 0
        %418 = vmatprep.subr.bf16.mxu0 0
        %419 = vmatpush1.bf16.msra.mxu0 0
        %420 = vmatprep.subr.bf16.mxu0 0
        %421 = vmatpush1.bf16.msra.mxu0 0
        %422 = vmatprep.subr.bf16.mxu0 0
        %423 = vmatpush1.bf16.msra.mxu0 0
        %424 = vmatprep.subr.bf16.mxu0 0
        %425 = vmatpush1.bf16.msra.mxu0 0
        %426 = vmatprep.subr.bf16.mxu0 0
        %427 = vmatpush1.bf16.msra.mxu0 0
        %428 = vmatprep.mubr.bf16.mxu0 0
        %429 = vmatmul.mubr.bf16.gmra.mrb[0].mxu0 %v381
        %v430 = vpop.f32.mrb[0].mxu0
        %v431 = vadd.f32 %v347, %v430
        %v432 = vpop.f32.mrb[0].mxu0
        %v433 = vadd.f32 %v347, %v432
        %v434 = vpop.f32.mrb[0].mxu0
        %v435 = vadd.f32 %v352, %v434
        %v436 = vpop.f32.mrb[0].mxu0
        %v437 = vadd.f32 %v352, %v436
        %438 = vmatprep.mubr.bf16.mxu0 0
        %439 = vmatmul.mubr.bf16.gmra.mrb[0].mxu0 %v384
        %v440 = vpop.f32.mrb[0].mxu0
        %v441 = vadd.f32 %v357, %v440
        %v442 = vpop.f32.mrb[0].mxu0
        %v443 = vadd.f32 %v357, %v442
        %v444 = vpop.f32.mrb[0].mxu0
        %v445 = vadd.f32 %v362, %v444
        %v446 = vpop.f32.mrb[0].mxu0
        %v447 = vadd.f32 %v362, %v446
        %448 = vdwg.mxu0
        %v449 = vmax.f32 %v431, 0.0
        %v450 = vmax.f32 %v433, 0.0
        %v451 = vmax.f32 %v435, 0.0
        %v452 = vmax.f32 %v437, 0.0
        %v453 = vmax.f32 %v441, 0.0
        %v454 = vmax.f32 %v443, 0.0
        %v455 = vmax.f32 %v445, 0.0
        %v456 = vmax.f32 %v447, 0.0
        %v457 = vld [vmem:[%s3] sm:$0xf]
        %v458 = vld [vmem:[%s3 + $0x4] sm:$0xf]
        %v459 = vld [vmem:[%s3 + $0x8] sm:$0xf]
        %v460 = vld [vmem:[%s3 + $0xc] sm:$0xf]
        %v461 = vld [vmem:[%s4] sm:$0xff]
        %v462 = vld [vmem:[%s4 + $0x8] sm:$0xff]
        %v463 = vld [vmem:[%s4 + $0x10] sm:$0xff]
        %v464 = vld [vmem:[%s4 + $0x18] sm:$0xff]
        %v465 = vpack.c.bf16 %v451, %v449
        %v466 = vpack.c.bf16 %v452, %v450
        %v467 = vpack.c.bf16 %v455, %v453
        %v468 = vpack.c.bf16 %v456, %v454
        %470 = vset.pattern.permute.xlu0 0
        %471 = vperm.xlu0 %470, %v461
        %v472 = vpop.permute.xlu0 %471
        %475 = vset.pattern.permute.xlu0 0
        %476 = vperm.xlu0 %475, %v462
        %v477 = vpop.permute.xlu0 %476
        %480 = vset.pattern.permute.xlu0 0
        %481 = vperm.xlu0 %480, %v463
        %v482 = vpop.permute.xlu0 %481
        %485 = vset.pattern.permute.xlu0 0
        %486 = vperm.xlu0 %485, %v464
        %v487 = vpop.permute.xlu0 %486
        %v493 = vunpack.c.l.b16 %v457
        %v494 = vunpack.c.l.b16 %v458
        %v495 = vunpack.c.l.b16 %v459
        %v496 = vunpack.c.l.b16 %v460
        %v497 = vpack.c.b16 %v494, %v493
        %v498 = vpack.c.b16 %v496, %v495
        %vm499 = vcmask 261120
        %v501 = vsel %vm499, %v497, 0
        %v504 = vsel %vm499, %v498, 0
        %506 = vmatprep.subr.bf16.mxu0 %v466
        %507 = vmatpush1.bf16.msra.mxu0 %v465
        %508 = vmatprep.subr.bf16.mxu0 %v468
        %509 = vmatpush1.bf16.msra.mxu0 %v467
        %510 = vmatprep.subr.bf16.mxu0 0
        %511 = vmatpush1.bf16.msra.mxu0 0
        %512 = vmatprep.subr.bf16.mxu0 0
        %513 = vmatpush1.bf16.msra.mxu0 0
        %514 = vmatprep.subr.bf16.mxu0 0
        %515 = vmatpush1.bf16.msra.mxu0 0
        %516 = vmatprep.subr.bf16.mxu0 0
        %517 = vmatpush1.bf16.msra.mxu0 0
        %518 = vmatprep.subr.bf16.mxu0 0
        %519 = vmatpush1.bf16.msra.mxu0 0
        %520 = vmatprep.subr.bf16.mxu0 0
        %521 = vmatpush1.bf16.msra.mxu0 0
        %522 = vmatprep.subr.bf16.mxu0 0
        %523 = vmatpush1.bf16.msra.mxu0 0
        %524 = vmatprep.subr.bf16.mxu0 0
        %525 = vmatpush1.bf16.msra.mxu0 0
        %526 = vmatprep.subr.bf16.mxu0 0
        %527 = vmatpush1.bf16.msra.mxu0 0
        %528 = vmatprep.subr.bf16.mxu0 0
        %529 = vmatpush1.bf16.msra.mxu0 0
        %530 = vmatprep.subr.bf16.mxu0 0
        %531 = vmatpush1.bf16.msra.mxu0 0
        %532 = vmatprep.subr.bf16.mxu0 0
        %533 = vmatpush1.bf16.msra.mxu0 0
        %534 = vmatprep.subr.bf16.mxu0 0
        %535 = vmatpush1.bf16.msra.mxu0 0
        %536 = vmatprep.subr.bf16.mxu0 0
        %537 = vmatpush1.bf16.msra.mxu0 0
        %538 = vmatprep.mubr.bf16.mxu0 0
        %539 = vmatmul.mubr.bf16.gmra.mrb[0].mxu0 %v501
        %v540 = vpop.f32.mrb[0].mxu0
        %v541 = vadd.f32 %v472, %v540
        %v542 = vpop.f32.mrb[0].mxu0
        %v543 = vadd.f32 %v472, %v542
        %v544 = vpop.f32.mrb[0].mxu0
        %v545 = vadd.f32 %v477, %v544
        %v546 = vpop.f32.mrb[0].mxu0
        %v547 = vadd.f32 %v477, %v546
        %548 = vmatprep.mubr.bf16.mxu0 0
        %549 = vmatmul.mubr.bf16.gmra.mrb[0].mxu0 %v504
        %v550 = vpop.f32.mrb[0].mxu0
        %v551 = vadd.f32 %v482, %v550
        %v552 = vpop.f32.mrb[0].mxu0
        %v553 = vadd.f32 %v482, %v552
        %v554 = vpop.f32.mrb[0].mxu0
        %v555 = vadd.f32 %v487, %v554
        %v556 = vpop.f32.mrb[0].mxu0
        %v557 = vadd.f32 %v487, %v556
        %558 = vdwg.mxu0
        %v559 = vmax.f32 %v541, 0.0
        %v560 = vmax.f32 %v543, 0.0
        %v561 = vmax.f32 %v545, 0.0
        %v562 = vmax.f32 %v547, 0.0
        %v563 = vmax.f32 %v551, 0.0
        %v564 = vmax.f32 %v553, 0.0
        %v565 = vmax.f32 %v555, 0.0
        %v566 = vmax.f32 %v557, 0.0
        %v567 = vld [vmem:[%s5] sm:$0xf]
        %v568 = vld [vmem:[%s5 + $0x4] sm:$0xf]
        %v569 = vld [vmem:[%s5 + $0x8] sm:$0xf]
        %v570 = vld [vmem:[%s5 + $0xc] sm:$0xf]
        %v571 = vld [vmem:[%s6] sm:$0xff]
        %v572 = vld [vmem:[%s6 + $0x8] sm:$0xff]
        %v573 = vld [vmem:[%s6 + $0x10] sm:$0xff]
        %v574 = vld [vmem:[%s6 + $0x18] sm:$0xff]
        %v575 = vpack.c.bf16 %v561, %v559
        %v576 = vpack.c.bf16 %v562, %v560
        %v577 = vpack.c.bf16 %v565, %v563
        %v578 = vpack.c.bf16 %v566, %v564
        %580 = vset.pattern.permute.xlu0 0
        %581 = vperm.xlu0 %580, %v571
        %v582 = vpop.permute.xlu0 %581
        %585 = vset.pattern.permute.xlu0 0
        %586 = vperm.xlu0 %585, %v572
        %v587 = vpop.permute.xlu0 %586
        %590 = vset.pattern.permute.xlu0 0
        %591 = vperm.xlu0 %590, %v573
        %v592 = vpop.permute.xlu0 %591
        %595 = vset.pattern.permute.xlu0 0
        %596 = vperm.xlu0 %595, %v574
        %v597 = vpop.permute.xlu0 %596
        %v603 = vunpack.c.l.b16 %v567
        %v604 = vunpack.c.l.b16 %v568
        %v605 = vunpack.c.l.b16 %v569
        %v606 = vunpack.c.l.b16 %v570
        %v607 = vpack.c.b16 %v604, %v603
        %v608 = vpack.c.b16 %v606, %v605
        %v610 = vsel %vm499, %v607, 0
        %v613 = vsel %vm499, %v608, 0
        %615 = vmatprep.subr.bf16.mxu0 %v576
        %616 = vmatpush1.bf16.msra.mxu0 %v575
        %617 = vmatprep.subr.bf16.mxu0 %v578
        %618 = vmatpush1.bf16.msra.mxu0 %v577
        %619 = vmatprep.subr.bf16.mxu0 0
        %620 = vmatpush1.bf16.msra.mxu0 0
        %621 = vmatprep.subr.bf16.mxu0 0
        %622 = vmatpush1.bf16.msra.mxu0 0
        %623 = vmatprep.subr.bf16.mxu0 0
        %624 = vmatpush1.bf16.msra.mxu0 0
        %625 = vmatprep.subr.bf16.mxu0 0
        %626 = vmatpush1.bf16.msra.mxu0 0
        %627 = vmatprep.subr.bf16.mxu0 0
        %628 = vmatpush1.bf16.msra.mxu0 0
        %629 = vmatprep.subr.bf16.mxu0 0
        %630 = vmatpush1.bf16.msra.mxu0 0
        %631 = vmatprep.subr.bf16.mxu0 0
        %632 = vmatpush1.bf16.msra.mxu0 0
        %633 = vmatprep.subr.bf16.mxu0 0
        %634 = vmatpush1.bf16.msra.mxu0 0
        %635 = vmatprep.subr.bf16.mxu0 0
        %636 = vmatpush1.bf16.msra.mxu0 0
        %637 = vmatprep.subr.bf16.mxu0 0
        %638 = vmatpush1.bf16.msra.mxu0 0
        %639 = vmatprep.subr.bf16.mxu0 0
        %640 = vmatpush1.bf16.msra.mxu0 0
        %641 = vmatprep.subr.bf16.mxu0 0
        %642 = vmatpush1.bf16.msra.mxu0 0
        %643 = vmatprep.subr.bf16.mxu0 0
        %644 = vmatpush1.bf16.msra.mxu0 0
        %645 = vmatprep.subr.bf16.mxu0 0
        %646 = vmatpush1.bf16.msra.mxu0 0
        %647 = vmatprep.mubr.bf16.mxu0 0
        %648 = vmatmul.mubr.bf16.gmra.mrb[0].mxu0 %v610
        %v649 = vpop.f32.mrb[0].mxu0
        %v650 = vadd.f32 %v582, %v649
        %v651 = vpop.f32.mrb[0].mxu0
        %v652 = vadd.f32 %v582, %v651
        %v653 = vpop.f32.mrb[0].mxu0
        %v654 = vadd.f32 %v587, %v653
        %v655 = vpop.f32.mrb[0].mxu0
        %v656 = vadd.f32 %v587, %v655
        %657 = vmatprep.mubr.bf16.mxu0 0
        %658 = vmatmul.mubr.bf16.gmra.mrb[0].mxu0 %v613
        %v659 = vpop.f32.mrb[0].mxu0
        %v660 = vadd.f32 %v592, %v659
        %v661 = vpop.f32.mrb[0].mxu0
        %v662 = vadd.f32 %v592, %v661
        %v663 = vpop.f32.mrb[0].mxu0
        %v664 = vadd.f32 %v597, %v663
        %v665 = vpop.f32.mrb[0].mxu0
        %v666 = vadd.f32 %v597, %v665
        %667 = vdwg.mxu0
        %v668 = vmax.f32 %v650, 0.0
        %v669 = vmax.f32 %v652, 0.0
        %v670 = vmax.f32 %v654, 0.0
        %v671 = vmax.f32 %v656, 0.0
        %v672 = vmax.f32 %v660, 0.0
        %v673 = vmax.f32 %v662, 0.0
        %v674 = vmax.f32 %v664, 0.0
        %v675 = vmax.f32 %v666, 0.0
        %v676 = vld [vmem:[%s7] sm:$0x3]
        %v677 = vld [vmem:[%s8] sm:$0xf]
        %v678 = vpack.c.bf16 %v670, %v668
        %v679 = vpack.c.bf16 %v671, %v669
        %v680 = vpack.c.bf16 %v674, %v672
        %v681 = vpack.c.bf16 %v675, %v673
        %683 = vset.pattern.permute.xlu0 0
        %684 = vperm.xlu0 %683, %v677
        %v685 = vpop.permute.xlu0 %684
        %v688 = vsel %vm499, %v676, 0
        %690 = vmatprep.subr.bf16.mxu0 %v679
        %691 = vmatpush1.bf16.msra.mxu0 %v678
        %692 = vmatprep.subr.bf16.mxu0 %v681
        %693 = vmatpush1.bf16.msra.mxu0 %v680
        %694 = vmatprep.subr.bf16.mxu0 0
        %695 = vmatpush1.bf16.msra.mxu0 0
        %696 = vmatprep.subr.bf16.mxu0 0
        %697 = vmatpush1.bf16.msra.mxu0 0
        %698 = vmatprep.subr.bf16.mxu0 0
        %699 = vmatpush1.bf16.msra.mxu0 0
        %700 = vmatprep.subr.bf16.mxu0 0
        %701 = vmatpush1.bf16.msra.mxu0 0
        %702 = vmatprep.subr.bf16.mxu0 0
        %703 = vmatpush1.bf16.msra.mxu0 0
        %704 = vmatprep.subr.bf16.mxu0 0
        %705 = vmatpush1.bf16.msra.mxu0 0
        %706 = vmatprep.subr.bf16.mxu0 0
        %707 = vmatpush1.bf16.msra.mxu0 0
        %708 = vmatprep.subr.bf16.mxu0 0
        %709 = vmatpush1.bf16.msra.mxu0 0
        %710 = vmatprep.subr.bf16.mxu0 0
        %711 = vmatpush1.bf16.msra.mxu0 0
        %712 = vmatprep.subr.bf16.mxu0 0
        %713 = vmatpush1.bf16.msra.mxu0 0
        %714 = vmatprep.subr.bf16.mxu0 0
        %715 = vmatpush1.bf16.msra.mxu0 0
        %716 = vmatprep.subr.bf16.mxu0 0
        %717 = vmatpush1.bf16.msra.mxu0 0
        %718 = vmatprep.subr.bf16.mxu0 0
        %719 = vmatpush1.bf16.msra.mxu0 0
        %720 = vmatprep.subr.bf16.mxu0 0
        %721 = vmatpush1.bf16.msra.mxu0 0
        %722 = vmatprep.mubr.bf16.mxu0 0
        %723 = vmatmul.mubr.bf16.gmra.mrb[0].mxu0 %v688
        %v724 = vpop.f32.mrb[0].mxu0
        %v725 = vadd.f32 %v685, %v724
        %v726 = vpop.f32.mrb[0].mxu0
        %v727 = vadd.f32 %v685, %v726
        %v728 = vpop.f32.mrb[0].mxu0
        %v729 = vpop.f32.mrb[0].mxu0
        %730 = vdwg.mxu0
        %v733 = vcombine.low %v725, %v727
        %735 = vst [vmem:[%s326] sm:$0xff] %v733
        %s736 = sand.u32 %s225, 1
        %s737 = scalar_lea.sflag [#allocation3], %s736
        %s738 = sand.u32 %s225, 1
        %s739 = smul.addr %s738, 8
        %s740 = scalar_lea.vmem [#allocation2], %s739
        // Predicated region
        $region57: #{tpu_custom_call.1} parent=55 // pred_check
          %p741 = pneg %p235
        $region58: #{tpu_custom_call.1} parent=55 // pred_check_branch
          %743 = sbr.rel (%p741) target = $region60
        $region59: #{tpu_custom_call.1} parent=55 // pred_region
          %s744 = smul.u32 2, %s23
          %s746 = ssub.s32 128, 128
          %747 = vsyncadd %s737, %s746
          %s748 = smul.addr %s744, 64
          %s749 = scalar_lea.hbm %s9, %s748
          %s751 = sshll.u32 %s740, 4
          %s752 = int_to_ptr.vmem [resolvable:$true] %s751
          %754 = dma.vmem_to_hbm [thread:$0]  %s752, 128, %s749, %s737
        $region60: #{tpu_custom_call.1} parent=55 // pred_fallthru
          _
      $region56: #{tpu_custom_call.1} parent=5 // pred_fallthru
        _
      %p755 = scmp.le.s32.totalorder 2, %s18
      // Predicated region
      $region61: #{tpu_custom_call.1} parent=5 // pred_check
        %p756 = pneg %p755
      $region62: #{tpu_custom_call.1} parent=5 // pred_check_branch
        %758 = sbr.rel (%p756) target = $region64
      $region63: #{tpu_custom_call.1} parent=5 // pred_region
        %s759 = ssub.s32 %s18, 2
        // Predicated region
        $region65: #{tpu_custom_call.1} parent=63 // pred_check
          %p760 = pneg %p241
        $region66: #{tpu_custom_call.1} parent=63 // pred_check_branch
          %762 = sbr.rel (%p760) target = $region68
        $region67: #{tpu_custom_call.1} parent=63 // pred_region
          %s763 = sand.u32 %s226, 1
          %s764 = scalar_lea.sflag [#allocation3], %s763
          %s765 = sand.u32 %s226, 1
          %s766 = smul.addr %s765, 8
          %s767 = scalar_lea.vmem [#allocation2], %s766
          %768 = dma.done %s764, 128
        $region68: #{tpu_custom_call.1} parent=63 // pred_fallthru
          _
      $region64: #{tpu_custom_call.1} parent=5 // pred_fallthru
        _
    $region6: #{tpu_custom_call.1} parent=1 // loop_footer
      %s22 = sadd.s32 1, %s18
    $region7: #{tpu_custom_call.1} parent=1 // loop_footer_branch
      %17 = sbr.rel target = $region3
    $region8: #{tpu_custom_call.1} parent=1 // loop_exit
      _
    %769 = vsyncpa [#allocation3], 1
    %s770 = scalar_lea.sflag [#allocation3], 1
    %771 = vsyncpa %s770, 1

</llo_original>
